<compile_context>
chip_gen: v7x
topology: tpu7x:2x2x1
jax: 0.10.0
libtpu: 0.0.40
codegen_flags: <defaults>
</compile_context>

<pallas_src>
import functools
import math

import jax
import jax.numpy as jnp
from jax import lax
from jax.experimental import pallas as pl
from jax.experimental.pallas import tpu as pltpu


def _round_up(x, m):
    return ((x + m - 1) // m) * m


def _im2col_nchw(x, k, s, p):
    """Extract overlapping patches. Returns (B, Ho*Wo, Cin*k*k), Ho, Wo."""
    B, C, H, W = x.shape
    xp = jnp.pad(x, ((0, 0), (0, 0), (p, p), (p, p)))
    Ho = (H + 2 * p - k) // s + 1
    Wo = (W + 2 * p - k) // s + 1
    hi = jnp.arange(Ho) * s                      # (Ho,)
    wi = jnp.arange(Wo) * s                      # (Wo,)
    kk = jnp.arange(k)
    patches = xp[:, :, hi[:, None] + kk[None, :], :]            # (B, C, Ho, k, Wp)
    patches = patches[:, :, :, :, wi[:, None] + kk[None, :]]    # (B, C, Ho, k, Wo, k)
    # -> (B, Ho, Wo, C, kh, kw); feature flattened as (C, kh, kw) to match conv weight layout
    patches = patches.transpose(0, 2, 4, 1, 3, 5)
    return patches.reshape(B, Ho * Wo, C * k * k), Ho, Wo


def _patch_embed_kernel(x_ref, w_ref, p_ref, o_ref, *, n_real):
    # x_ref: (tm, Kp) bf16   w_ref: (Kp, Np) bf16   p_ref: (3, Np) f32   o_ref: (tm, Np) f32
    y = jnp.dot(x_ref[...], w_ref[...], preferred_element_type=jnp.float32)  # MXU, f32 acc
    y = y + p_ref[0:1, :]                                   # conv bias (0 in padded columns)
    # LayerNorm over the REAL embed_dim: padded columns of y are exactly 0, so plain sums are
    # exact; divide by n_real, not the padded width. All stats in f32 (v5e has no bf16 VPU/EUP).
    inv_n = jnp.float32(1.0 / n_real)
    mean = jnp.sum(y, axis=-1, keepdims=True) * inv_n
    msq = jnp.sum(y * y, axis=-1, keepdims=True) * inv_n
    var = msq - mean * mean
    yn = (y - mean) * lax.rsqrt(var + 1e-5)                 # nn.LayerNorm default eps
    o_ref[...] = (yn * p_ref[1:2, :] + p_ref[2:3, :]).astype(o_ref.dtype)


def overlap_patch_embed(x, conv_w, conv_b, ln_w, ln_b, *, patch_size, stride, tm_max=512):
    """x: (B, Cin, H, W) NCHW. Returns (tokens, Ho, Wo) with tokens (B, Ho*Wo, embed_dim) f32."""
    B, Cin, H, W = x.shape
    embed_dim = conv_w.shape[0]
    k = patch_size
    p = patch_size // 2

    # im2col in bf16 (halves HBM bytes of the materialized patch matrix).
    cols, Ho, Wo = _im2col_nchw(x.astype(jnp.bfloat16), k, stride, p)   # (B, Ho*Wo, Cin*k*k)
    M = B * Ho * Wo
    K = Cin * k * k

    # Lane-dense padding: K and N to multiples of 128 (zeros don't change the dot / LN stats).
    Kp = _round_up(K, 128)
    Np = _round_up(embed_dim, 128)

    # Row tile: as large as practical, but always >= 2 grid steps (v7x has 2 TensorCores).
    tm = min(tm_max, max(8, _round_up(-(-M // 2), 8)))
    Mp = _round_up(M, tm)
    grid = (Mp // tm,)

    cols2d = cols.reshape(M, K)
    cols2d = jnp.pad(cols2d, ((0, Mp - M), (0, Kp - K)))                # bf16, (Mp, Kp)

    # (embed_dim, Cin, kh, kw) -> (Cin*kh*kw, embed_dim), zero-padded to (Kp, Np), bf16.
    w2d = conv_w.reshape(embed_dim, K).T.astype(jnp.float32)
    w2d = jnp.pad(w2d, ((0, Kp - K), (0, Np - embed_dim))).astype(jnp.bfloat16)

    # Fuse conv bias / LN gamma / LN beta into one f32 operand (fewer per-step DMAs).
    params = jnp.zeros((3, Np), jnp.float32)
    params = params.at[0, :embed_dim].set(conv_b.astype(jnp.float32))
    params = params.at[1, :embed_dim].set(ln_w.astype(jnp.float32))
    params = params.at[2, :embed_dim].set(ln_b.astype(jnp.float32))

    # Explicit VMEM budget: double-buffered input/output tiles + resident weight + params.
    vmem_est = (2 * tm * Kp * 2          # bf16 input tile, double-buffered
                + 2 * tm * Np * 4        # f32 output tile, double-buffered
                + 2 * Kp * Np * 2        # bf16 weight (conservatively double-buffered)
                + 2 * 3 * Np * 4)        # fused bias/gamma/beta
    vmem_limit = int(min(max(2 * vmem_est, 32 * 1024 * 1024), 60 * 1024 * 1024))  # v7x-safe cap

    out = pl.pallas_call(
        functools.partial(_patch_embed_kernel, n_real=embed_dim),
        out_shape=jax.ShapeDtypeStruct((Mp, Np), jnp.float32),
        grid_spec=pltpu.PrefetchScalarGridSpec(
            num_scalar_prefetch=0,
            grid=grid,
            in_specs=[
                pl.BlockSpec((tm, Kp), lambda i: (i, 0)),
                pl.BlockSpec((Kp, Np), lambda i: (0, 0)),
                pl.BlockSpec((3, Np), lambda i: (0, 0)),
            ],
            out_specs=pl.BlockSpec((tm, Np), lambda i: (i, 0)),
        ),
        compiler_params=pltpu.CompilerParams(
            dimension_semantics=("parallel",),
            vmem_limit_bytes=vmem_limit,
        ),
    )(cols2d, w2d, params)

    out = out[:M, :embed_dim]                               # drop row/lane padding
    return out.reshape(B, Ho * Wo, embed_dim), Ho, Wo


def _reference(x, conv_w, conv_b, ln_w, ln_b, *, patch_size, stride):
    """Pure-JAX f32 reference (lax conv + layernorm) for validation."""
    p = patch_size // 2
    y = lax.conv_general_dilated(
        x.astype(jnp.float32), conv_w.astype(jnp.float32),
        window_strides=(stride, stride), padding=((p, p), (p, p)),
        dimension_numbers=("NCHW", "OIHW", "NCHW"))
    y = y + conv_b.reshape(1, -1, 1, 1)
    B, C, Ho, Wo = y.shape
    t = y.reshape(B, C, Ho * Wo).transpose(0, 2, 1)          # (B, HW, C)
    mean = t.mean(-1, keepdims=True)
    var = ((t - mean) ** 2).mean(-1, keepdims=True)
    tn = (t - mean) * lax.rsqrt(var + 1e-5)
    return tn * ln_w + ln_b, Ho, Wo


if __name__ == "__main__":
    # Small config consistent with the module: img=16, patch=7, stride=4, in_chans=4, embed_dim=32
    B, Cin, H, W = 2, 4, 16, 16
    patch_size, stride, embed_dim = 7, 4, 32

    key = jax.random.PRNGKey(0)
    kx, kw = jax.random.split(key)

    x = jax.random.normal(kx, (B, Cin, H, W), dtype=jnp.float32)

    # Deterministic init mirroring _init_weights:
    fan_out = patch_size * patch_size * embed_dim
    conv_w = jax.random.normal(kw, (embed_dim, Cin, patch_size, patch_size),
                               dtype=jnp.float32) * math.sqrt(2.0 / fan_out)
    conv_b = jnp.zeros((embed_dim,), jnp.float32)
    ln_w = jnp.ones((embed_dim,), jnp.float32)
    ln_b = jnp.zeros((embed_dim,), jnp.float32)

    tokens, Ho, Wo = overlap_patch_embed(
        x, conv_w, conv_b, ln_w, ln_b, patch_size=patch_size, stride=stride)
    tokens = jax.block_until_ready(tokens)

    ref, Ho_r, Wo_r = _reference(
        x, conv_w, conv_b, ln_w, ln_b, patch_size=patch_size, stride=stride)
    assert (Ho, Wo) == (Ho_r, Wo_r)
    assert tokens.shape == (B, Ho * Wo, embed_dim)
    max_err = float(jnp.max(jnp.abs(tokens - ref)))
    # bf16 inputs/weights with f32 accumulation vs. a pure-f32 reference.
    assert max_err < 3e-2, f"max abs err too large: {max_err}"

    print("KERNEL_OK")
</pallas_src>

<mosaic_0001>
module attributes {stable_mosaic.version = 11 : i64} {
  func.func @_patch_embed_kernel(%arg0: i32, %arg1: memref<16x256xbf16, #tpu.memory_space<vmem>>, %arg2: memref<256x128xbf16, #tpu.memory_space<vmem>>, %arg3: memref<3x128xf32, #tpu.memory_space<vmem>>, %arg4: memref<16x128xf32, #tpu.memory_space<vmem>>) attributes {dimension_semantics = [#tpu.dimension_semantics<parallel>], iteration_bounds = array<i64: 2>, scalar_prefetch = 0 : i64, scratch_operands = 0 : i64, tpu.core_type = #tpu.core_type<tc>, window_params = [{transform_indices = @transform_0, window_bounds = array<i64: 16, 256>}, {pipeline_mode = #tpu.pipeline_mode<synchronous>, transform_indices = @transform_1, window_bounds = array<i64: 256, 128>}, {pipeline_mode = #tpu.pipeline_mode<synchronous>, transform_indices = @transform_2, window_bounds = array<i64: 3, 128>}, {transform_indices = @transform_3, window_bounds = array<i64: 16, 128>}]} {
    %c0 = arith.constant 0 : index
    %c0_0 = arith.constant 0 : index
    %0 = vector.load %arg1[%c0, %c0_0] : memref<16x256xbf16, #tpu.memory_space<vmem>>, vector<16x256xbf16>
    %c0_1 = arith.constant 0 : index
    %c0_2 = arith.constant 0 : index
    %1 = vector.load %arg2[%c0_1, %c0_2] : memref<256x128xbf16, #tpu.memory_space<vmem>>, vector<256x128xbf16>
    %cst = arith.constant dense<0.000000e+00> : vector<16x128xf32>
    %2 = tpu.matmul %0, %1, %cst {dimension_numbers = #tpu.dot_dimension_numbers<[1], [0], [0], [1], [0, 0, 1, 1], [], []>} : vector<16x256xbf16>, vector<256x128xbf16>, vector<16x128xf32> -> vector<16x128xf32>
    %c0_3 = arith.constant 0 : index
    %c0_4 = arith.constant 0 : index
    %3 = vector.load %arg3[%c0_3, %c0_4] : memref<3x128xf32, #tpu.memory_space<vmem>>, vector<1x128xf32>
    %4 = vector.broadcast %3 : vector<1x128xf32> to vector<16x128xf32>
    %5 = arith.addf %2, %4 : vector<16x128xf32>
    %cst_5 = arith.constant dense<0.000000e+00> : vector<16xf32>
    %6 = vector.multi_reduction <add>, %5, %cst_5 [1] : vector<16x128xf32> to vector<16xf32>
    %7 = vector.shape_cast %6 : vector<16xf32> to vector<16x1xf32>
    %cst_6 = arith.constant 3.125000e-02 : f32
    %8 = vector.broadcast %cst_6 : f32 to vector<16x1xf32>
    %9 = arith.mulf %7, %8 : vector<16x1xf32>
    %10 = arith.mulf %5, %5 : vector<16x128xf32>
    %cst_7 = arith.constant dense<0.000000e+00> : vector<16xf32>
    %11 = vector.multi_reduction <add>, %10, %cst_7 [1] : vector<16x128xf32> to vector<16xf32>
    %12 = vector.shape_cast %11 : vector<16xf32> to vector<16x1xf32>
    %cst_8 = arith.constant 3.125000e-02 : f32
    %13 = vector.broadcast %cst_8 : f32 to vector<16x1xf32>
    %14 = arith.mulf %12, %13 : vector<16x1xf32>
    %15 = arith.mulf %9, %9 : vector<16x1xf32>
    %16 = arith.subf %14, %15 : vector<16x1xf32>
    %17 = vector.broadcast %9 : vector<16x1xf32> to vector<16x128xf32>
    %18 = arith.subf %5, %17 : vector<16x128xf32>
    %cst_9 = arith.constant 9.99999974E-6 : f32
    %19 = vector.broadcast %cst_9 : f32 to vector<16x1xf32>
    %20 = arith.addf %16, %19 : vector<16x1xf32>
    %21 = math.rsqrt %20 : vector<16x1xf32>
    %22 = vector.broadcast %21 : vector<16x1xf32> to vector<16x128xf32>
    %23 = arith.mulf %18, %22 : vector<16x128xf32>
    %c1 = arith.constant 1 : index
    %c0_10 = arith.constant 0 : index
    %24 = vector.load %arg3[%c1, %c0_10] : memref<3x128xf32, #tpu.memory_space<vmem>>, vector<1x128xf32>
    %25 = vector.broadcast %24 : vector<1x128xf32> to vector<16x128xf32>
    %26 = arith.mulf %23, %25 : vector<16x128xf32>
    %c2 = arith.constant 2 : index
    %c0_11 = arith.constant 0 : index
    %27 = vector.load %arg3[%c2, %c0_11] : memref<3x128xf32, #tpu.memory_space<vmem>>, vector<1x128xf32>
    %28 = vector.broadcast %27 : vector<1x128xf32> to vector<16x128xf32>
    %29 = arith.addf %26, %28 : vector<16x128xf32>
    %c0_12 = arith.constant 0 : index
    %c0_13 = arith.constant 0 : index
    %30 = vector.load %arg4[%c0_12, %c0_13] : memref<16x128xf32, #tpu.memory_space<vmem>>, vector<16x128xf32>
    tpu.vector_store %arg4[%c0_12, %c0_13], %29 {strides = array<i32>} : memref<16x128xf32, #tpu.memory_space<vmem>>, vector<16x128xf32>,
    return
  }
  func.func @transform_0(%arg0: i32) -> (i32, i32) {
    %c0_i32 = arith.constant 0 : i32
    %c0_i32_0 = arith.constant 0 : i32
    return %arg0, %c0_i32 : i32, i32
  }
  func.func @transform_1(%arg0: i32) -> (i32, i32) {
    %c0_i32 = arith.constant 0 : i32
    %c0_i32_0 = arith.constant 0 : i32
    %c0_i32_1 = arith.constant 0 : i32
    return %c0_i32, %c0_i32_0 : i32, i32
  }
  func.func @transform_2(%arg0: i32) -> (i32, i32) {
    %c0_i32 = arith.constant 0 : i32
    %c0_i32_0 = arith.constant 0 : i32
    %c0_i32_1 = arith.constant 0 : i32
    return %c0_i32, %c0_i32_0 : i32, i32
  }
  func.func @transform_3(%arg0: i32) -> (i32, i32) {
    %c0_i32 = arith.constant 0 : i32
    %c0_i32_0 = arith.constant 0 : i32
    return %arg0, %c0_i32 : i32, i32
  }
}

</mosaic_0001>

<llo_original>
// kernel: tpu_custom_call.1
$region0: #{tpu_custom_call.1}
  #allocation0 [shape = 'u32[]', space=smem, size = 0x4, offset = 0x4, fixed_abs, tag = 'smem constant byte address 0x4 - core index']
  #allocation1 [shape = 'u32[144,128]{1,0:T(1,128)}', space=vmem, size = 0x12000, scoped, tag = 'internal scratch']
  %s0 = inlined_call_operand.hbm [shape: bf16[32,256], index: 0, kind: input, shape index: {}]
  %s1 = inlined_call_operand.hbm [shape: bf16[256,128], index: 1, kind: input, shape index: {}]
  %s2 = inlined_call_operand.vmem [shape: f32[3,128], index: 2, kind: input, shape index: {}]
  %s3 = inlined_call_operand.hbm [shape: f32[32,128], index: 3, kind: output, shape index: {}]
  %s4 = sld [smem:[#allocation0]]
  $region53: #{tpu_custom_call.1} parent=0
    _
  %s6 = ssub.s32 1, %s4
  %s7 = scalar_select 0, %s6, %s4
  $region1: #{tpu_custom_call.1} parent=0
    #allocation2 [shape = 'u8[16384]{0}', space=vmem, size = 0x4000, scoped, tag = 'input window, operand 0']
    #allocation3 [shape = 's32[2]{0}', space=sflag, size = 0x8, scoped, tag = 'scoped memory for tpu_custom_call.1']
    #allocation4 [shape = 's32[2]{0}', space=sflag, size = 0x8, scoped, tag = 'scoped memory for tpu_custom_call.1']
    #allocation5 [shape = 'u8[65536]{0}', space=vmem, size = 0x10000, scoped, tag = 'input window, operand 1, single buffered']
    #allocation6 [shape = 's32[1]{0}', space=sflag, size = 0x4, scoped, tag = 'scoped memory for tpu_custom_call.1']
    #allocation7 [shape = 'u8[16384]{0}', space=vmem, size = 0x4000, scoped, tag = 'output window, operand 0']
    %8 = vsyncpa [#allocation3], 0
    %s9 = scalar_lea.sflag [#allocation3], 1
    %10 = vsyncpa %s9, 0
    %11 = vsyncpa [#allocation6], 0
    %12 = vsyncpa [#allocation4], 0
    %s13 = scalar_lea.sflag [#allocation4], 1
    %14 = vsyncpa %s13, 0
    loop: start=0, step=1, limit=4
    $region2: #{tpu_custom_call.1} parent=1 // loop_pre_header
      _
    $region3: #{tpu_custom_call.1} parent=1 // loop_header
      %s16 = sphi 0, %s20
      %p17 = scmp.ge.s32.totalorder %s16, 4
      %s26 = sphi 0, %s28
      %s29 = sphi 0, %s26
      %s30 = sphi 0, %s29
      %s46 = sphi 0, %s30
      %s50 = sphi 0, %s50
      %s52 = sphi 0, %s50
      %s53 = sphi 0, %s52
      %s67 = sphi 0, %s53
      %s71 = sphi 0, %s71
      %s73 = sphi 0, %s71
      %s74 = sphi 0, %s73
      %s88 = sphi 0, %s74
      %s94 = sphi 0, %s96
      %s97 = sphi 0, %s94
      %s98 = sphi 0, %s97
      %s114 = sphi 0, %s98
    $region4: #{tpu_custom_call.1} parent=1 // loop_header_branch
      %19 = sbr.rel (%p17) target = $region8
    $region5: #{tpu_custom_call.1} parent=1 // loop_body
      %s21 = ssub.s32 %s16, 1
      %s22 = ssub.s32 %s16, 2
      %s23 = sadd.s32 %s16, 1
      %s24 = ssub.s32 %s16, %s23
      %p25 = scmp.eq.s32.totalorder %s24, 0
      %s27 = sadd.s32 %s26, 1
      %s28 = scalar_select %p25, %s26, %s27
      %p31 = pneg %p25
      %p32 = scmp.eq.s32.totalorder %s16, 1
      %p33 = por %p31, %p32
      %p34 = scmp.ne.s32.totalorder %s26, %s29
      %p35 = scmp.eq.s32.totalorder %s16, 0
      %p36 = por %p34, %p35
      %p37 = scmp.ne.s32.totalorder %s26, %s29
      %p38 = scmp.eq.s32.totalorder %s21, 1
      %p39 = por %p37, %p38
      %p40 = scmp.ne.s32.totalorder %s29, %s30
      %p41 = scmp.eq.s32.totalorder %s21, 0
      %p42 = por %p40, %p41
      %p43 = scmp.ne.s32.totalorder %s29, %s30
      %p44 = scmp.eq.s32.totalorder %s22, 1
      %p45 = por %p43, %p44
      %p47 = scmp.ne.s32.totalorder %s30, %s46
      %p48 = scmp.eq.s32.totalorder %s22, 0
      %p49 = por %p47, %p48
      %s51 = sadd.s32 %s50, 1
      %p54 = scmp.eq.s32.totalorder %s16, 1
      %p55 = scmp.ne.s32.totalorder %s50, %s52
      %p56 = scmp.eq.s32.totalorder %s16, 0
      %p57 = por %p55, %p56
      %p58 = scmp.ne.s32.totalorder %s50, %s52
      %p59 = scmp.eq.s32.totalorder %s21, 1
      %p60 = por %p58, %p59
      %p61 = scmp.ne.s32.totalorder %s52, %s53
      %p62 = scmp.eq.s32.totalorder %s21, 0
      %p63 = por %p61, %p62
      %p64 = scmp.ne.s32.totalorder %s52, %s53
      %p65 = scmp.eq.s32.totalorder %s22, 1
      %p66 = por %p64, %p65
      %p68 = scmp.ne.s32.totalorder %s53, %s67
      %p69 = scmp.eq.s32.totalorder %s22, 0
      %p70 = por %p68, %p69
      %s72 = sadd.s32 %s71, 1
      %p75 = scmp.eq.s32.totalorder %s16, 1
      %p76 = scmp.ne.s32.totalorder %s71, %s73
      %p77 = scmp.eq.s32.totalorder %s16, 0
      %p78 = por %p76, %p77
      %p79 = scmp.ne.s32.totalorder %s71, %s73
      %p80 = scmp.eq.s32.totalorder %s21, 1
      %p81 = por %p79, %p80
      %p82 = scmp.ne.s32.totalorder %s73, %s74
      %p83 = scmp.eq.s32.totalorder %s21, 0
      %p84 = por %p82, %p83
      %p85 = scmp.ne.s32.totalorder %s73, %s74
      %p86 = scmp.eq.s32.totalorder %s22, 1
      %p87 = por %p85, %p86
      %p89 = scmp.ne.s32.totalorder %s74, %s88
      %p90 = scmp.eq.s32.totalorder %s22, 0
      %p91 = por %p89, %p90
      %s92 = ssub.s32 %s16, %s23
      %p93 = scmp.eq.s32.totalorder %s92, 0
      %s95 = sadd.s32 %s94, 1
      %s96 = scalar_select %p93, %s94, %s95
      %p99 = pneg %p93
      %p100 = scmp.eq.s32.totalorder %s16, 1
      %p101 = por %p99, %p100
      %p102 = scmp.ne.s32.totalorder %s94, %s97
      %p103 = scmp.eq.s32.totalorder %s16, 0
      %p104 = por %p102, %p103
      %p105 = scmp.ne.s32.totalorder %s94, %s97
      %p106 = scmp.eq.s32.totalorder %s21, 1
      %p107 = por %p105, %p106
      %p108 = scmp.ne.s32.totalorder %s97, %s98
      %p109 = scmp.eq.s32.totalorder %s21, 0
      %p110 = por %p108, %p109
      %p111 = scmp.ne.s32.totalorder %s97, %s98
      %p112 = scmp.eq.s32.totalorder %s22, 1
      %p113 = por %p111, %p112
      %p115 = scmp.ne.s32.totalorder %s98, %s114
      %p116 = scmp.eq.s32.totalorder %s22, 0
      %p117 = por %p115, %p116
      %p118 = scmp.le.s32.totalorder 1, %s16
      %p119 = scmp.lt.s32.totalorder %s16, 3
      %p120 = pnand %p118, %p119
      %p121 = pneg %p120
      // Predicated region
      $region9: #{tpu_custom_call.1} parent=5 // pred_check
        _
      $region10: #{tpu_custom_call.1} parent=5 // pred_check_branch
        %123 = sbr.rel (%p120) target = $region12
      $region11: #{tpu_custom_call.1} parent=5 // pred_region
        %s124 = ssub.s32 %s16, 1
        // Predicated region
        $region13: #{tpu_custom_call.1} parent=11 // pred_check
          %p125 = pneg %p63
        $region14: #{tpu_custom_call.1} parent=11 // pred_check_branch
          %127 = sbr.rel (%p125) target = $region16
        $region15: #{tpu_custom_call.1} parent=11 // pred_region
          %s129 = ssub.s32 2048, 2048
          %130 = vsyncadd [#allocation6], %s129
          %s131 = sshll.u32 [#allocation5], 4
          %s132 = int_to_ptr.vmem [resolvable:$true] %s131
          %137 = dma.hbm_to_vmem [thread:$0]  %s1, 2048, %s132, [#allocation6], 64, 64, 4
        $region16: #{tpu_custom_call.1} parent=11 // pred_fallthru
          _
        // Predicated region
        $region17: #{tpu_custom_call.1} parent=11 // pred_check
          %p138 = pneg %p84
        $region18: #{tpu_custom_call.1} parent=11 // pred_check_branch
          %140 = sbr.rel (%p138) target = $region20
        $region19: #{tpu_custom_call.1} parent=11 // pred_region
          _
        $region20: #{tpu_custom_call.1} parent=11 // pred_fallthru
          _
      $region12: #{tpu_custom_call.1} parent=5 // pred_fallthru
        _
      %p141 = scmp.lt.s32.totalorder %s16, 2
      // Predicated region
      $region21: #{tpu_custom_call.1} parent=5 // pred_check
        %p142 = pneg %p141
      $region22: #{tpu_custom_call.1} parent=5 // pred_check_branch
        %144 = sbr.rel (%p142) target = $region24
      $region23: #{tpu_custom_call.1} parent=5 // pred_region
        // Predicated region
        $region25: #{tpu_custom_call.1} parent=23 // pred_check
          %p145 = pneg %p36
        $region26: #{tpu_custom_call.1} parent=23 // pred_check_branch
          %147 = sbr.rel (%p145) target = $region28
        $region27: #{tpu_custom_call.1} parent=23 // pred_region
          %s148 = sand.u32 %s26, 1
          %s149 = scalar_lea.sflag [#allocation3], %s148
          %s150 = sand.u32 %s26, 1
          %s151 = smul.addr %s150, 16
          %s152 = scalar_lea.vmem [#allocation2], %s151
          %s153 = smul.u32 2, %s16
          %s155 = ssub.s32 256, 256
          %156 = vsyncadd %s149, %s155
          %s157 = smul.addr %s153, 2
          %s158 = smul.addr %s157, 64
          %s159 = scalar_lea.hbm %s0, %s158
          %s160 = sshll.u32 %s152, 4
          %s161 = int_to_ptr.vmem [resolvable:$true] %s160
          %166 = dma.hbm_to_vmem [thread:$0]  %s159, 256, %s161, %s149, 128, 128, 8
        $region28: #{tpu_custom_call.1} parent=23 // pred_fallthru
          _
      $region24: #{tpu_custom_call.1} parent=5 // pred_fallthru
        _
      %p167 = scmp.le.s32.totalorder 1, %s16
      %p168 = scmp.lt.s32.totalorder %s16, 3
      %p169 = pnand %p167, %p168
      %p170 = pneg %p169
      // Predicated region
      $region29: #{tpu_custom_call.1} parent=5 // pred_check
        _
      $region30: #{tpu_custom_call.1} parent=5 // pred_check_branch
        %172 = sbr.rel (%p169) target = $region32
      $region31: #{tpu_custom_call.1} parent=5 // pred_region
        %s173 = ssub.s32 %s16, 1
        %s174 = sand.u32 %s29, 1
        %s175 = scalar_lea.sflag [#allocation3], %s174
        %s176 = sand.u32 %s29, 1
        %s177 = smul.addr %s176, 16
        %s178 = scalar_lea.vmem [#allocation2], %s177
        // Predicated region
        $region33: #{tpu_custom_call.1} parent=31 // pred_check
          %p179 = pneg %p42
        $region34: #{tpu_custom_call.1} parent=31 // pred_check_branch
          %181 = sbr.rel (%p179) target = $region36
        $region35: #{tpu_custom_call.1} parent=31 // pred_region
          %182 = dma.done %s175, 256
        $region36: #{tpu_custom_call.1} parent=31 // pred_fallthru
          _
        // Predicated region
        $region37: #{tpu_custom_call.1} parent=31 // pred_check
          %p183 = pneg %p63
        $region38: #{tpu_custom_call.1} parent=31 // pred_check_branch
          %185 = sbr.rel (%p183) target = $region40
        $region39: #{tpu_custom_call.1} parent=31 // pred_region
          %186 = dma.done [#allocation6], 2048
        $region40: #{tpu_custom_call.1} parent=31 // pred_fallthru
          _
        %s187 = sand.u32 %s29, 1
        %s188 = scalar_lea.sflag [#allocation3], %s187
        %s189 = sand.u32 %s29, 1
        %s190 = smul.addr %s189, 16
        %s191 = scalar_lea.vmem [#allocation2], %s190
        %p192 = pneg %p42
        %p193 = pneg %p39
        %p194 = pneg %p63
        %p195 = pneg %p60
        %p196 = pneg %p84
        %p197 = pneg %p81
        %p198 = pneg %p110
        %p199 = pneg %p107
        %s200 = sand.u32 %s97, 1
        %s201 = scalar_lea.sflag [#allocation4], %s200
        %s202 = sand.u32 %s97, 1
        %s203 = smul.addr %s202, 16
        %s204 = scalar_lea.vmem [#allocation7], %s203
        %s205 = smul.u32 2, %s21
        %s206 = smul.u32 2, %s21
        %v208 = vld [vmem:[%s178] sm:$0xff]
        %v209 = vld [vmem:[%s178 + $0x8] sm:$0xff]
        %v210 = vld [vmem:[#allocation5] sm:$0xf]
        %v211 = vld [vmem:[#allocation5 + $0x4] sm:$0xf]
        %v212 = vld [vmem:[#allocation5 + $0x8] sm:$0xf]
        %v213 = vld [vmem:[#allocation5 + $0xc] sm:$0xf]
        %v214 = vld [vmem:[#allocation5 + $0x10] sm:$0xf]
        %v215 = vld [vmem:[#allocation5 + $0x14] sm:$0xf]
        %v216 = vld [vmem:[#allocation5 + $0x18] sm:$0xf]
        %v217 = vld [vmem:[#allocation5 + $0x1c] sm:$0xf]
        %v218 = vld [vmem:[#allocation5 + $0x20] sm:$0xf]
        %v219 = vld [vmem:[#allocation5 + $0x24] sm:$0xf]
        %v220 = vld [vmem:[#allocation5 + $0x28] sm:$0xf]
        %v221 = vld [vmem:[#allocation5 + $0x2c] sm:$0xf]
        %v222 = vld [vmem:[#allocation5 + $0x30] sm:$0xf]
        %v223 = vld [vmem:[#allocation5 + $0x34] sm:$0xf]
        %v224 = vld [vmem:[#allocation5 + $0x38] sm:$0xf]
        %v225 = vld [vmem:[#allocation5 + $0x3c] sm:$0xf]
        %v226 = vld [vmem:[#allocation5 + $0x40] sm:$0xf]
        %v227 = vld [vmem:[#allocation5 + $0x44] sm:$0xf]
        %v228 = vld [vmem:[#allocation5 + $0x48] sm:$0xf]
        %v229 = vld [vmem:[#allocation5 + $0x4c] sm:$0xf]
        %v230 = vld [vmem:[#allocation5 + $0x50] sm:$0xf]
        %v231 = vld [vmem:[#allocation5 + $0x54] sm:$0xf]
        %v232 = vld [vmem:[#allocation5 + $0x58] sm:$0xf]
        %v233 = vld [vmem:[#allocation5 + $0x5c] sm:$0xf]
        %v234 = vld [vmem:[#allocation5 + $0x60] sm:$0xf]
        %v235 = vld [vmem:[#allocation5 + $0x64] sm:$0xf]
        %v236 = vld [vmem:[#allocation5 + $0x68] sm:$0xf]
        %v237 = vld [vmem:[#allocation5 + $0x6c] sm:$0xf]
        %v238 = vld [vmem:[#allocation5 + $0x70] sm:$0xf]
        %v239 = vld [vmem:[#allocation5 + $0x74] sm:$0xf]
        %v240 = vld [vmem:[#allocation5 + $0x78] sm:$0xf]
        %v241 = vld [vmem:[#allocation5 + $0x7c] sm:$0xf]
        %v242 = vld [vmem:[%s2] sm:$0x1]
        %v243 = vlaneseq
        %v244 = vshrl.u32 %v243, 7
        %v245 = vsub.s32 0, %v244
        %v246 = vrot.slane %v242, %v245
        %v249 = vunpack.c.l.b16 %v208
        %v250 = vunpack.c.h.b16 %v208
        %v251 = vunpack.c.l.b16 %v209
        %v252 = vunpack.c.h.b16 %v209
        %v253 = vpack.c.b16 %v251, %v249
        %v254 = vpack.c.b16 %v252, %v250
        %v289 = vunpack.c.l.b16 %v210
        %v290 = vunpack.c.l.b16 %v211
        %v291 = vunpack.c.l.b16 %v212
        %v292 = vunpack.c.l.b16 %v213
        %v293 = vunpack.c.l.b16 %v214
        %v294 = vunpack.c.l.b16 %v215
        %v295 = vunpack.c.l.b16 %v216
        %v296 = vunpack.c.l.b16 %v217
        %v297 = vunpack.c.l.b16 %v218
        %v298 = vunpack.c.l.b16 %v219
        %v299 = vunpack.c.l.b16 %v220
        %v300 = vunpack.c.l.b16 %v221
        %v301 = vunpack.c.l.b16 %v222
        %v302 = vunpack.c.l.b16 %v223
        %v303 = vunpack.c.l.b16 %v224
        %v304 = vunpack.c.l.b16 %v225
        %v305 = vunpack.c.l.b16 %v226
        %v306 = vunpack.c.l.b16 %v227
        %v307 = vunpack.c.l.b16 %v228
        %v308 = vunpack.c.l.b16 %v229
        %v309 = vunpack.c.l.b16 %v230
        %v310 = vunpack.c.l.b16 %v231
        %v311 = vunpack.c.l.b16 %v232
        %v312 = vunpack.c.l.b16 %v233
        %v313 = vunpack.c.l.b16 %v234
        %v314 = vunpack.c.l.b16 %v235
        %v315 = vunpack.c.l.b16 %v236
        %v316 = vunpack.c.l.b16 %v237
        %v317 = vunpack.c.l.b16 %v238
        %v318 = vunpack.c.l.b16 %v239
        %v319 = vunpack.c.l.b16 %v240
        %v320 = vunpack.c.l.b16 %v241
        %v321 = vpack.c.b16 %v290, %v289
        %v322 = vpack.c.b16 %v292, %v291
        %v323 = vpack.c.b16 %v294, %v293
        %v324 = vpack.c.b16 %v296, %v295
        %v325 = vpack.c.b16 %v298, %v297
        %v326 = vpack.c.b16 %v300, %v299
        %v327 = vpack.c.b16 %v302, %v301
        %v328 = vpack.c.b16 %v304, %v303
        %v329 = vpack.c.b16 %v306, %v305
        %v330 = vpack.c.b16 %v308, %v307
        %v331 = vpack.c.b16 %v310, %v309
        %v332 = vpack.c.b16 %v312, %v311
        %v333 = vpack.c.b16 %v314, %v313
        %v334 = vpack.c.b16 %v316, %v315
        %v335 = vpack.c.b16 %v318, %v317
        %v336 = vpack.c.b16 %v320, %v319
        %353 = vmatprep.subr.bf16.mxu0 0
        %354 = vmatpush1.bf16.msra.mxu0 %v321
        %355 = vmatprep.subr.bf16.mxu0 0
        %356 = vmatpush1.bf16.msra.mxu0 %v322
        %357 = vmatprep.subr.bf16.mxu0 0
        %358 = vmatpush1.bf16.msra.mxu0 %v323
        %359 = vmatprep.subr.bf16.mxu0 0
        %360 = vmatpush1.bf16.msra.mxu0 %v324
        %361 = vmatprep.subr.bf16.mxu0 0
        %362 = vmatpush1.bf16.msra.mxu0 %v325
        %363 = vmatprep.subr.bf16.mxu0 0
        %364 = vmatpush1.bf16.msra.mxu0 %v326
        %365 = vmatprep.subr.bf16.mxu0 0
        %366 = vmatpush1.bf16.msra.mxu0 %v327
        %367 = vmatprep.subr.bf16.mxu0 0
        %368 = vmatpush1.bf16.msra.mxu0 %v328
        %369 = vmatprep.subr.bf16.mxu0 0
        %370 = vmatpush1.bf16.msra.mxu0 %v329
        %371 = vmatprep.subr.bf16.mxu0 0
        %372 = vmatpush1.bf16.msra.mxu0 %v330
        %373 = vmatprep.subr.bf16.mxu0 0
        %374 = vmatpush1.bf16.msra.mxu0 %v331
        %375 = vmatprep.subr.bf16.mxu0 0
        %376 = vmatpush1.bf16.msra.mxu0 %v332
        %377 = vmatprep.subr.bf16.mxu0 0
        %378 = vmatpush1.bf16.msra.mxu0 %v333
        %379 = vmatprep.subr.bf16.mxu0 0
        %380 = vmatpush1.bf16.msra.mxu0 %v334
        %381 = vmatprep.subr.bf16.mxu0 0
        %382 = vmatpush1.bf16.msra.mxu0 %v335
        %383 = vmatprep.subr.bf16.mxu0 0
        %384 = vmatpush1.bf16.msra.mxu0 %v336
        %385 = vmatprep.mubr.bf16.mxu0 %v254
        %386 = vmatmul.mubr.bf16.gmra.mrb[0].mxu0 %v253
        %v387 = vpop.f32.mrb[0].mxu0
        %v388 = vadd.f32 %v246, %v387
        %v389 = vpop.f32.mrb[0].mxu0
        %v390 = vpop.f32.mrb[0].mxu0
        %v391 = vadd.f32 %v246, %v390
        %v392 = vpop.f32.mrb[0].mxu0
        %393 = vdwg.mxu0
        %394 = vadd.xlane.f32.xlu0 %v388
        %v395 = vpop.xlane.xlu0 %394
        %396 = vadd.xlane.f32.xlu0 %v391
        %v397 = vpop.xlane.xlu0 %396
        %v398 = vmul.f32 %v395, 0.03125
        %v399 = vmul.f32 %v397, 0.03125
        %v400 = vmul.f32 %v388, %v388
        %v401 = vmul.f32 %v391, %v391
        %402 = vadd.xlane.f32.xlu0 %v400
        %v403 = vpop.xlane.xlu0 %402
        %404 = vadd.xlane.f32.xlu0 %v401
        %v405 = vpop.xlane.xlu0 %404
        %v406 = vmul.f32 %v403, 0.03125
        %v407 = vmul.f32 %v405, 0.03125
        %v408 = vmul.f32 %v398, %v398
        %v409 = vmul.f32 %v399, %v399
        %v410 = vsub.f32 %v406, %v408
        %v411 = vsub.f32 %v407, %v409
        %v412 = vsub.f32 %v388, %v398
        %v413 = vsub.f32 %v391, %v399
        %v414 = vadd.f32 %v410, 1e-05
        %v415 = vadd.f32 %v411, 1e-05
        %v416 = vrsqrt.pop %v414
        %v417 = vrsqrt.pop %v415
        %v418 = vmul.f32 %v412, %v416
        %v419 = vmul.f32 %v413, %v417
        %v420 = vld [vmem:[%s2 + $0x1] sm:$0x1]
        %v421 = vlaneseq
        %v422 = vshrl.u32 %v421, 7
        %v423 = vsub.s32 0, %v422
        %v424 = vrot.slane %v420, %v423
        %v425 = vmul.f32 %v418, %v424
        %v426 = vmul.f32 %v419, %v424
        %v427 = vld [vmem:[%s2 + $0x2] sm:$0x1]
        %v428 = vlaneseq
        %v429 = vshrl.u32 %v428, 7
        %v430 = vsub.s32 0, %v429
        %v431 = vrot.slane %v427, %v430
        %v432 = vadd.f32 %v425, %v431
        %v433 = vadd.f32 %v426, %v431
        %434 = vst [vmem:[%s204] sm:$0xff] %v432
        %435 = vst [vmem:[%s204 + $0x8] sm:$0xff] %v433
        %s436 = sand.u32 %s97, 1
        %s437 = scalar_lea.sflag [#allocation4], %s436
        %s438 = sand.u32 %s97, 1
        %s439 = smul.addr %s438, 16
        %s440 = scalar_lea.vmem [#allocation7], %s439
        // Predicated region
        $region41: #{tpu_custom_call.1} parent=31 // pred_check
          %p441 = pneg %p107
        $region42: #{tpu_custom_call.1} parent=31 // pred_check_branch
          %443 = sbr.rel (%p441) target = $region44
        $region43: #{tpu_custom_call.1} parent=31 // pred_region
          %s444 = smul.u32 2, %s21
          %s446 = ssub.s32 256, 256
          %447 = vsyncadd %s437, %s446
          %s448 = smul.addr %s444, 128
          %s449 = scalar_lea.hbm %s3, %s448
          %s450 = sshll.u32 %s440, 4
          %s451 = int_to_ptr.vmem [resolvable:$true] %s450
          %456 = dma.vmem_to_hbm [thread:$0]  %s451, 256, %s449, %s437, 128, 128, 8
        $region44: #{tpu_custom_call.1} parent=31 // pred_fallthru
          _
      $region32: #{tpu_custom_call.1} parent=5 // pred_fallthru
        _
      %p457 = scmp.le.s32.totalorder 2, %s16
      // Predicated region
      $region45: #{tpu_custom_call.1} parent=5 // pred_check
        %p458 = pneg %p457
      $region46: #{tpu_custom_call.1} parent=5 // pred_check_branch
        %460 = sbr.rel (%p458) target = $region48
      $region47: #{tpu_custom_call.1} parent=5 // pred_region
        %s461 = ssub.s32 %s16, 2
        // Predicated region
        $region49: #{tpu_custom_call.1} parent=47 // pred_check
          %p462 = pneg %p113
        $region50: #{tpu_custom_call.1} parent=47 // pred_check_branch
          %464 = sbr.rel (%p462) target = $region52
        $region51: #{tpu_custom_call.1} parent=47 // pred_region
          %s465 = sand.u32 %s98, 1
          %s466 = scalar_lea.sflag [#allocation4], %s465
          %s467 = sand.u32 %s98, 1
          %s468 = smul.addr %s467, 16
          %s469 = scalar_lea.vmem [#allocation7], %s468
          %470 = dma.done %s466, 256
        $region52: #{tpu_custom_call.1} parent=47 // pred_fallthru
          _
      $region48: #{tpu_custom_call.1} parent=5 // pred_fallthru
        _
    $region6: #{tpu_custom_call.1} parent=1 // loop_footer
      %s20 = sadd.s32 1, %s16
    $region7: #{tpu_custom_call.1} parent=1 // loop_footer_branch
      %15 = sbr.rel target = $region3
    $region8: #{tpu_custom_call.1} parent=1 // loop_exit
      _
    %471 = vsyncpa [#allocation3], 1
    %s472 = scalar_lea.sflag [#allocation3], 1
    %473 = vsyncpa %s472, 1
    %474 = vsyncpa [#allocation6], 1
    %475 = vsyncpa [#allocation4], 1
    %s476 = scalar_lea.sflag [#allocation4], 1
    %477 = vsyncpa %s476, 1

</llo_original>
